<compile_context>
chip_gen: v7x
topology: tpu7x:2x2x1
jax: 0.10.0
libtpu: 0.0.40
codegen_flags: <defaults>
</compile_context>

<pallas_src>
import functools

import jax
import jax.numpy as jnp
from jax.experimental import pallas as pl
from jax.experimental.pallas import tpu as pltpu

LANE = 128      # vreg lane width
SUBLANE = 8     # vreg sublane width (f32)
HID = 64        # hidden width of the module
HID_PAD = 128   # hidden width padded to one full lane width


def _round_up(n, m):
    return ((n + m - 1) // m) * m


def _cdiv(a, b):
    return -(-a // b)


def mapping_kernel(x_ref, w1_ref, b15_ref, wmid_ref, w6_ref, b6_ref, out_ref):
    """Fused (Linear -> LeakyReLU(0.2)) x 6 on one batch tile.

    Matmuls run bf16 x bf16 -> f32 on the MXU; bias-add + LeakyReLU are done
    in f32 on the accumulator, activations carried as bf16 between layers.
    """

    def act(y):
        # LeakyReLU(0.2): single max instead of compare+select.
        return jnp.maximum(y, 0.2 * y)

    # ---- layer 1: (tb, z_dim) -> (tb, 128) ----
    h = x_ref[...].astype(jnp.bfloat16)
    y = jnp.dot(h, w1_ref[...], preferred_element_type=jnp.float32)
    y = act(y + b15_ref[pl.ds(0, 1), :])
    h = y.astype(jnp.bfloat16)

    # ---- layers 2..5: 64 -> 64 (zero-padded to 128 -> 128) ----
    for l in range(4):
        y = jnp.dot(h, wmid_ref[l], preferred_element_type=jnp.float32)
        y = act(y + b15_ref[pl.ds(l + 1, 1), :])
        h = y.astype(jnp.bfloat16)

    # ---- layer 6: 64 -> w_dim (zero-padded to 128 -> out_pad) ----
    y = jnp.dot(h, w6_ref[...], preferred_element_type=jnp.float32)
    y = act(y + b6_ref[...])
    out_ref[...] = y.astype(out_ref.dtype)


@functools.partial(jax.jit, static_argnames=("common_dim", "block_b"))
def mapping_from_latent(x, params, common_dim, *, block_b=1024):
    """x: (B, z_dim) f32. params: 6 tuples (W, b) with W (in, out), b (1, out).

    Returns (full, common) = (x_out, x_out[:, :common_dim]) like the PyTorch
    forward.
    """
    B, z_dim = x.shape
    w_dim = params[-1][0].shape[1]
    out_pad = _round_up(max(w_dim, 1), LANE)

    # Balanced batch tiles: split B as evenly as possible into at most
    # cdiv(B, block_b) tiles, rounded to a sublane multiple.  Pallas masks the
    # writes of the (at most one) partial edge tile.
    n_tiles = max(1, _cdiv(B, block_b))
    tb = _round_up(_cdiv(B, n_tiles), SUBLANE)
    grid = (_cdiv(B, tb),)

    (W1, b1), (W2, b2), (W3, b3), (W4, b4), (W5, b5), (W6, b6) = params

    # Zero-padded bf16 weights / f32 biases, consolidated into few streams.
    w1_p = jnp.zeros((z_dim, HID_PAD), jnp.bfloat16)
    w1_p = w1_p.at[:, :HID].set(W1.astype(jnp.bfloat16))

    wmid = jnp.zeros((4, HID_PAD, HID_PAD), jnp.bfloat16)
    for l, W in enumerate((W2, W3, W4, W5)):
        wmid = wmid.at[l, :HID, :HID].set(W.astype(jnp.bfloat16))

    b15 = jnp.zeros((5, HID_PAD), jnp.float32)
    for l, b in enumerate((b1, b2, b3, b4, b5)):
        b15 = b15.at[l, :HID].set(b.reshape(-1).astype(jnp.float32))

    w6_p = jnp.zeros((HID_PAD, out_pad), jnp.bfloat16)
    w6_p = w6_p.at[:HID, :w_dim].set(W6.astype(jnp.bfloat16))
    b6_p = jnp.zeros((1, out_pad), jnp.float32)
    b6_p = b6_p.at[:, :w_dim].set(b6.reshape(1, -1).astype(jnp.float32))

    out_p = pl.pallas_call(
        mapping_kernel,
        out_shape=jax.ShapeDtypeStruct((B, out_pad), jnp.bfloat16),
        grid_spec=pltpu.PrefetchScalarGridSpec(
            num_scalar_prefetch=0,
            grid=grid,
            in_specs=[
                # Activations: tiled over batch, unpadded f32 input.
                pl.BlockSpec((tb, z_dim), lambda i: (i, 0)),
                # Weights / biases: constant index maps -> DMA'd once,
                # VMEM-resident across all batch tiles.
                pl.BlockSpec((z_dim, HID_PAD), lambda i: (0, 0)),
                pl.BlockSpec((5, HID_PAD), lambda i: (0, 0)),
                pl.BlockSpec((4, HID_PAD, HID_PAD), lambda i: (0, 0, 0)),
                pl.BlockSpec((HID_PAD, out_pad), lambda i: (0, 0)),
                pl.BlockSpec((1, out_pad), lambda i: (0, 0)),
            ],
            out_specs=pl.BlockSpec((tb, out_pad), lambda i: (i, 0)),
        ),
        compiler_params=pltpu.CompilerParams(
            dimension_semantics=("parallel",),  # batch tiles split across TCs
        ),
    )(x, w1_p, b15, wmid, w6_p, b6_p)

    # Slice once (lane-dense bf16 kernel output -> f32, w_dim columns).
    full = out_p[:, :w_dim].astype(jnp.float32)
    common = full[:, :common_dim]
    return full, common


def init_params(key, z_dim, w_dim):
    """Deterministic Xavier-normal weights, zero biases (matches initialize_weights)."""
    dims = [z_dim, HID, HID, HID, HID, HID, w_dim]
    params = []
    for i in range(6):
        fan_in, fan_out = dims[i], dims[i + 1]
        key, sub = jax.random.split(key)
        std = (2.0 / (fan_in + fan_out)) ** 0.5
        W = std * jax.random.normal(sub, (fan_in, fan_out), dtype=jnp.float32)
        b = jnp.zeros((1, fan_out), dtype=jnp.float32)
        params.append((W, b))
    return params


if __name__ == "__main__":
    # Small, module-consistent shapes.
    B, z_dim, w_dim, common_dim = 8, 32, 48, 16

    key = jax.random.PRNGKey(0)
    key, kx = jax.random.split(key)
    x = jax.random.normal(kx, (B, z_dim), dtype=jnp.float32)

    params = init_params(key, z_dim, w_dim)

    full, common = mapping_from_latent(x, params, common_dim)
    jax.block_until_ready((full, common))

    # Reference using the same bf16-operand / f32-accumulate / bf16-output math.
    def ref(x, params):
        h = x.astype(jnp.float32)
        for (W, b) in params:
            y = jnp.dot(h.astype(jnp.bfloat16), W.astype(jnp.bfloat16),
                        preferred_element_type=jnp.float32) + b.astype(jnp.float32)
            h = jnp.maximum(y, 0.2 * y)
        return h.astype(jnp.bfloat16).astype(jnp.float32)

    r = ref(x, params)
    assert full.shape == (B, w_dim)
    assert common.shape == (B, common_dim)
    assert jnp.allclose(full, r, atol=2e-2, rtol=2e-2), \
        float(jnp.max(jnp.abs(full - r)))
    assert jnp.allclose(common, r[:, :common_dim], atol=2e-2, rtol=2e-2)

    print("KERNEL_OK")
</pallas_src>

<mosaic_0001>
module attributes {stable_mosaic.version = 11 : i64} {
  func.func @mapping_kernel(%arg0: i32, %arg1: memref<8x32xf32, #tpu.memory_space<vmem>>, %arg2: memref<32x128xbf16, #tpu.memory_space<vmem>>, %arg3: memref<5x128xf32, #tpu.memory_space<vmem>>, %arg4: memref<4x128x128xbf16, #tpu.memory_space<vmem>>, %arg5: memref<128x128xbf16, #tpu.memory_space<vmem>>, %arg6: memref<1x128xf32, #tpu.memory_space<vmem>>, %arg7: memref<8x128xbf16, #tpu.memory_space<vmem>>) attributes {dimension_semantics = [#tpu.dimension_semantics<parallel>], iteration_bounds = array<i64: 1>, scalar_prefetch = 0 : i64, scratch_operands = 0 : i64, tpu.core_type = #tpu.core_type<tc>, window_params = [{transform_indices = @transform_0, window_bounds = array<i64: 8, 32>}, {pipeline_mode = #tpu.pipeline_mode<synchronous>, transform_indices = @transform_1, window_bounds = array<i64: 32, 128>}, {pipeline_mode = #tpu.pipeline_mode<synchronous>, transform_indices = @transform_2, window_bounds = array<i64: 5, 128>}, {pipeline_mode = #tpu.pipeline_mode<synchronous>, transform_indices = @transform_3, window_bounds = array<i64: 4, 128, 128>}, {pipeline_mode = #tpu.pipeline_mode<synchronous>, transform_indices = @transform_4, window_bounds = array<i64: 128, 128>}, {pipeline_mode = #tpu.pipeline_mode<synchronous>, transform_indices = @transform_5, window_bounds = array<i64: 1, 128>}, {transform_indices = @transform_6, window_bounds = array<i64: 8, 128>}]} {
    %c0 = arith.constant 0 : index
    %c0_0 = arith.constant 0 : index
    %0 = vector.load %arg1[%c0, %c0_0] : memref<8x32xf32, #tpu.memory_space<vmem>>, vector<8x32xf32>
    %1 = arith.truncf %0 : vector<8x32xf32> to vector<8x32xbf16>
    %c0_1 = arith.constant 0 : index
    %c0_2 = arith.constant 0 : index
    %2 = vector.load %arg2[%c0_1, %c0_2] : memref<32x128xbf16, #tpu.memory_space<vmem>>, vector<32x128xbf16>
    %cst = arith.constant dense<0.000000e+00> : vector<8x128xf32>
    %3 = tpu.matmul %1, %2, %cst {dimension_numbers = #tpu.dot_dimension_numbers<[1], [0], [0], [1], [0, 0, 1, 1], [], []>} : vector<8x32xbf16>, vector<32x128xbf16>, vector<8x128xf32> -> vector<8x128xf32>
    %c0_3 = arith.constant 0 : index
    %c0_4 = arith.constant 0 : index
    %4 = vector.load %arg3[%c0_3, %c0_4] : memref<5x128xf32, #tpu.memory_space<vmem>>, vector<1x128xf32>
    %5 = vector.broadcast %4 : vector<1x128xf32> to vector<8x128xf32>
    %6 = arith.addf %3, %5 : vector<8x128xf32>
    %cst_5 = arith.constant 2.000000e-01 : f32
    %7 = vector.broadcast %cst_5 : f32 to vector<8x128xf32>
    %8 = arith.mulf %7, %6 : vector<8x128xf32>
    %9 = arith.maximumf %6, %8 : vector<8x128xf32>
    %10 = arith.truncf %9 : vector<8x128xf32> to vector<8x128xbf16>
    %c0_6 = arith.constant 0 : index
    %c0_7 = arith.constant 0 : index
    %c0_8 = arith.constant 0 : index
    %11 = vector.load %arg4[%c0_6, %c0_7, %c0_8] : memref<4x128x128xbf16, #tpu.memory_space<vmem>>, vector<1x128x128xbf16>
    %12 = vector.shape_cast %11 : vector<1x128x128xbf16> to vector<128x128xbf16>
    %cst_9 = arith.constant dense<0.000000e+00> : vector<8x128xf32>
    %13 = tpu.matmul %10, %12, %cst_9 {dimension_numbers = #tpu.dot_dimension_numbers<[1], [0], [0], [1], [0, 0, 1, 1], [], []>} : vector<8x128xbf16>, vector<128x128xbf16>, vector<8x128xf32> -> vector<8x128xf32>
    %c1 = arith.constant 1 : index
    %c0_10 = arith.constant 0 : index
    %14 = vector.load %arg3[%c1, %c0_10] : memref<5x128xf32, #tpu.memory_space<vmem>>, vector<1x128xf32>
    %15 = vector.broadcast %14 : vector<1x128xf32> to vector<8x128xf32>
    %16 = arith.addf %13, %15 : vector<8x128xf32>
    %cst_11 = arith.constant 2.000000e-01 : f32
    %17 = vector.broadcast %cst_11 : f32 to vector<8x128xf32>
    %18 = arith.mulf %17, %16 : vector<8x128xf32>
    %19 = arith.maximumf %16, %18 : vector<8x128xf32>
    %20 = arith.truncf %19 : vector<8x128xf32> to vector<8x128xbf16>
    %c1_12 = arith.constant 1 : index
    %c0_13 = arith.constant 0 : index
    %c0_14 = arith.constant 0 : index
    %21 = vector.load %arg4[%c1_12, %c0_13, %c0_14] : memref<4x128x128xbf16, #tpu.memory_space<vmem>>, vector<1x128x128xbf16>
    %22 = vector.shape_cast %21 : vector<1x128x128xbf16> to vector<128x128xbf16>
    %cst_15 = arith.constant dense<0.000000e+00> : vector<8x128xf32>
    %23 = tpu.matmul %20, %22, %cst_15 {dimension_numbers = #tpu.dot_dimension_numbers<[1], [0], [0], [1], [0, 0, 1, 1], [], []>} : vector<8x128xbf16>, vector<128x128xbf16>, vector<8x128xf32> -> vector<8x128xf32>
    %c2 = arith.constant 2 : index
    %c0_16 = arith.constant 0 : index
    %24 = vector.load %arg3[%c2, %c0_16] : memref<5x128xf32, #tpu.memory_space<vmem>>, vector<1x128xf32>
    %25 = vector.broadcast %24 : vector<1x128xf32> to vector<8x128xf32>
    %26 = arith.addf %23, %25 : vector<8x128xf32>
    %cst_17 = arith.constant 2.000000e-01 : f32
    %27 = vector.broadcast %cst_17 : f32 to vector<8x128xf32>
    %28 = arith.mulf %27, %26 : vector<8x128xf32>
    %29 = arith.maximumf %26, %28 : vector<8x128xf32>
    %30 = arith.truncf %29 : vector<8x128xf32> to vector<8x128xbf16>
    %c2_18 = arith.constant 2 : index
    %c0_19 = arith.constant 0 : index
    %c0_20 = arith.constant 0 : index
    %31 = vector.load %arg4[%c2_18, %c0_19, %c0_20] : memref<4x128x128xbf16, #tpu.memory_space<vmem>>, vector<1x128x128xbf16>
    %32 = vector.shape_cast %31 : vector<1x128x128xbf16> to vector<128x128xbf16>
    %cst_21 = arith.constant dense<0.000000e+00> : vector<8x128xf32>
    %33 = tpu.matmul %30, %32, %cst_21 {dimension_numbers = #tpu.dot_dimension_numbers<[1], [0], [0], [1], [0, 0, 1, 1], [], []>} : vector<8x128xbf16>, vector<128x128xbf16>, vector<8x128xf32> -> vector<8x128xf32>
    %c3 = arith.constant 3 : index
    %c0_22 = arith.constant 0 : index
    %34 = vector.load %arg3[%c3, %c0_22] : memref<5x128xf32, #tpu.memory_space<vmem>>, vector<1x128xf32>
    %35 = vector.broadcast %34 : vector<1x128xf32> to vector<8x128xf32>
    %36 = arith.addf %33, %35 : vector<8x128xf32>
    %cst_23 = arith.constant 2.000000e-01 : f32
    %37 = vector.broadcast %cst_23 : f32 to vector<8x128xf32>
    %38 = arith.mulf %37, %36 : vector<8x128xf32>
    %39 = arith.maximumf %36, %38 : vector<8x128xf32>
    %40 = arith.truncf %39 : vector<8x128xf32> to vector<8x128xbf16>
    %c3_24 = arith.constant 3 : index
    %c0_25 = arith.constant 0 : index
    %c0_26 = arith.constant 0 : index
    %41 = vector.load %arg4[%c3_24, %c0_25, %c0_26] : memref<4x128x128xbf16, #tpu.memory_space<vmem>>, vector<1x128x128xbf16>
    %42 = vector.shape_cast %41 : vector<1x128x128xbf16> to vector<128x128xbf16>
    %cst_27 = arith.constant dense<0.000000e+00> : vector<8x128xf32>
    %43 = tpu.matmul %40, %42, %cst_27 {dimension_numbers = #tpu.dot_dimension_numbers<[1], [0], [0], [1], [0, 0, 1, 1], [], []>} : vector<8x128xbf16>, vector<128x128xbf16>, vector<8x128xf32> -> vector<8x128xf32>
    %c4 = arith.constant 4 : index
    %c0_28 = arith.constant 0 : index
    %44 = vector.load %arg3[%c4, %c0_28] : memref<5x128xf32, #tpu.memory_space<vmem>>, vector<1x128xf32>
    %45 = vector.broadcast %44 : vector<1x128xf32> to vector<8x128xf32>
    %46 = arith.addf %43, %45 : vector<8x128xf32>
    %cst_29 = arith.constant 2.000000e-01 : f32
    %47 = vector.broadcast %cst_29 : f32 to vector<8x128xf32>
    %48 = arith.mulf %47, %46 : vector<8x128xf32>
    %49 = arith.maximumf %46, %48 : vector<8x128xf32>
    %50 = arith.truncf %49 : vector<8x128xf32> to vector<8x128xbf16>
    %c0_30 = arith.constant 0 : index
    %c0_31 = arith.constant 0 : index
    %51 = vector.load %arg5[%c0_30, %c0_31] : memref<128x128xbf16, #tpu.memory_space<vmem>>, vector<128x128xbf16>
    %cst_32 = arith.constant dense<0.000000e+00> : vector<8x128xf32>
    %52 = tpu.matmul %50, %51, %cst_32 {dimension_numbers = #tpu.dot_dimension_numbers<[1], [0], [0], [1], [0, 0, 1, 1], [], []>} : vector<8x128xbf16>, vector<128x128xbf16>, vector<8x128xf32> -> vector<8x128xf32>
    %c0_33 = arith.constant 0 : index
    %c0_34 = arith.constant 0 : index
    %53 = vector.load %arg6[%c0_33, %c0_34] : memref<1x128xf32, #tpu.memory_space<vmem>>, vector<1x128xf32>
    %54 = vector.broadcast %53 : vector<1x128xf32> to vector<8x128xf32>
    %55 = arith.addf %52, %54 : vector<8x128xf32>
    %cst_35 = arith.constant 2.000000e-01 : f32
    %56 = vector.broadcast %cst_35 : f32 to vector<8x128xf32>
    %57 = arith.mulf %56, %55 : vector<8x128xf32>
    %58 = arith.maximumf %55, %57 : vector<8x128xf32>
    %59 = arith.truncf %58 : vector<8x128xf32> to vector<8x128xbf16>
    %c0_36 = arith.constant 0 : index
    %c0_37 = arith.constant 0 : index
    %60 = vector.load %arg7[%c0_36, %c0_37] : memref<8x128xbf16, #tpu.memory_space<vmem>>, vector<8x128xbf16>
    tpu.vector_store %arg7[%c0_36, %c0_37], %59 {strides = array<i32>} : memref<8x128xbf16, #tpu.memory_space<vmem>>, vector<8x128xbf16>,
    return
  }
  func.func @transform_0(%arg0: i32) -> (i32, i32) {
    %c0_i32 = arith.constant 0 : i32
    %c0_i32_0 = arith.constant 0 : i32
    return %arg0, %c0_i32 : i32, i32
  }
  func.func @transform_1(%arg0: i32) -> (i32, i32) {
    %c0_i32 = arith.constant 0 : i32
    %c0_i32_0 = arith.constant 0 : i32
    %c0_i32_1 = arith.constant 0 : i32
    return %c0_i32, %c0_i32_0 : i32, i32
  }
  func.func @transform_2(%arg0: i32) -> (i32, i32) {
    %c0_i32 = arith.constant 0 : i32
    %c0_i32_0 = arith.constant 0 : i32
    %c0_i32_1 = arith.constant 0 : i32
    return %c0_i32, %c0_i32_0 : i32, i32
  }
  func.func @transform_3(%arg0: i32) -> (i32, i32, i32) {
    %c0_i32 = arith.constant 0 : i32
    %c0_i32_0 = arith.constant 0 : i32
    %c0_i32_1 = arith.constant 0 : i32
    %c0_i32_2 = arith.constant 0 : i32
    return %c0_i32, %c0_i32_0, %c0_i32_1 : i32, i32, i32
  }
  func.func @transform_4(%arg0: i32) -> (i32, i32) {
    %c0_i32 = arith.constant 0 : i32
    %c0_i32_0 = arith.constant 0 : i32
    %c0_i32_1 = arith.constant 0 : i32
    return %c0_i32, %c0_i32_0 : i32, i32
  }
  func.func @transform_5(%arg0: i32) -> (i32, i32) {
    %c0_i32 = arith.constant 0 : i32
    %c0_i32_0 = arith.constant 0 : i32
    %c0_i32_1 = arith.constant 0 : i32
    return %c0_i32, %c0_i32_0 : i32, i32
  }
  func.func @transform_6(%arg0: i32) -> (i32, i32) {
    %c0_i32 = arith.constant 0 : i32
    %c0_i32_0 = arith.constant 0 : i32
    return %arg0, %c0_i32 : i32, i32
  }
}

</mosaic_0001>

<llo_original>
// kernel: mapping_from_latent.1
$region0: #{mapping_from_latent.1}
  #allocation0 [shape = 'u32[]', space=smem, size = 0x4, offset = 0x4, fixed_abs, tag = 'smem constant byte address 0x4 - core index']
  #allocation1 [shape = 'u32[144,128]{1,0:T(1,128)}', space=vmem, size = 0x12000, scoped, tag = 'internal scratch']
  %s0 = inlined_call_operand.vmem [shape: f32[8,32], index: 0, kind: input, shape index: {}]
  %s1 = inlined_call_operand.vmem [shape: bf16[32,128], index: 1, kind: input, shape index: {}]
  %s2 = inlined_call_operand.vmem [shape: f32[5,128], index: 2, kind: input, shape index: {}]
  %s3 = inlined_call_operand.vmem [shape: bf16[4,128,128], index: 3, kind: input, shape index: {}]
  %s4 = inlined_call_operand.vmem [shape: bf16[128,128], index: 4, kind: input, shape index: {}]
  %s5 = inlined_call_operand.vmem [shape: f32[1,128], index: 5, kind: input, shape index: {}]
  %s6 = inlined_call_operand.vmem [shape: bf16[8,128], index: 6, kind: output, shape index: {}]
  %s7 = sld [smem:[#allocation0]]
  $region34: #{mapping_from_latent.1} parent=0
    _
  %s9 = ssub.s32 1, %s7
  %s10 = scalar_select 0, %s9, %s7
  // Predicated region
  $region2: #{mapping_from_latent.1} parent=0 // pred_check
    _
  $region3: #{mapping_from_latent.1} parent=0 // pred_check_branch
    %12 = sbr.rel (0) target = $region5
  $region4: #{mapping_from_latent.1} parent=0 // pred_region
    _
  $region5: #{mapping_from_latent.1} parent=0 // pred_fallthru
    _
  // Predicated region
  $region6: #{mapping_from_latent.1} parent=0 // pred_check
    _
  $region7: #{mapping_from_latent.1} parent=0 // pred_check_branch
    %14 = sbr.rel (0) target = $region9
  $region8: #{mapping_from_latent.1} parent=0 // pred_region
    _
  $region9: #{mapping_from_latent.1} parent=0 // pred_fallthru
    _
  // Predicated region
  $region10: #{mapping_from_latent.1} parent=0 // pred_check
    _
  $region11: #{mapping_from_latent.1} parent=0 // pred_check_branch
    %16 = sbr.rel (0) target = $region13
  $region12: #{mapping_from_latent.1} parent=0 // pred_region
    _
  $region13: #{mapping_from_latent.1} parent=0 // pred_fallthru
    _
  // Predicated region
  $region14: #{mapping_from_latent.1} parent=0 // pred_check
    _
  $region15: #{mapping_from_latent.1} parent=0 // pred_check_branch
    %18 = sbr.rel (0) target = $region17
  $region16: #{mapping_from_latent.1} parent=0 // pred_region
    _
  $region17: #{mapping_from_latent.1} parent=0 // pred_fallthru
    _
  // Predicated region
  $region18: #{mapping_from_latent.1} parent=0 // pred_check
    _
  $region19: #{mapping_from_latent.1} parent=0 // pred_check_branch
    %20 = sbr.rel (0) target = $region21
  $region20: #{mapping_from_latent.1} parent=0 // pred_region
    _
  $region21: #{mapping_from_latent.1} parent=0 // pred_fallthru
    _
  // Predicated region
  $region22: #{mapping_from_latent.1} parent=0 // pred_check
    _
  $region23: #{mapping_from_latent.1} parent=0 // pred_check_branch
    %22 = sbr.rel (0) target = $region25
  $region24: #{mapping_from_latent.1} parent=0 // pred_region
    _
  $region25: #{mapping_from_latent.1} parent=0 // pred_fallthru
    _
  %v24 = vld [vmem:[%s0] sm:$0xff]
  %v25 = vpack.c.bf16 %v24, %v24
  %v26 = vld [vmem:[%s1] sm:$0xf]
  %v27 = vld [vmem:[%s1 + $0x4] sm:$0xf]
  %v28 = vld [vmem:[%s1 + $0x8] sm:$0xf]
  %v29 = vld [vmem:[%s1 + $0xc] sm:$0xf]
  %v30 = vld [vmem:[%s2] sm:$0x1]
  %v31 = vlaneseq
  %v32 = vshrl.u32 %v31, 7
  %v33 = vsub.s32 0, %v32
  %v34 = vrot.slane %v30, %v33
  %v39 = vunpack.c.l.b16 %v26
  %v40 = vunpack.c.l.b16 %v27
  %v41 = vunpack.c.l.b16 %v28
  %v42 = vunpack.c.l.b16 %v29
  %v43 = vpack.c.b16 %v40, %v39
  %v44 = vpack.c.b16 %v42, %v41
  %vm47 = vcmask 261120
  %v49 = vsel %vm47, %v25, 0
  %51 = vmatprep.subr.bf16.mxu0 0
  %52 = vmatpush1.bf16.msra.mxu0 %v43
  %53 = vmatprep.subr.bf16.mxu0 0
  %54 = vmatpush1.bf16.msra.mxu0 %v44
  %55 = vmatprep.subr.bf16.mxu0 0
  %56 = vmatpush1.bf16.msra.mxu0 0
  %57 = vmatprep.subr.bf16.mxu0 0
  %58 = vmatpush1.bf16.msra.mxu0 0
  %59 = vmatprep.subr.bf16.mxu0 0
  %60 = vmatpush1.bf16.msra.mxu0 0
  %61 = vmatprep.subr.bf16.mxu0 0
  %62 = vmatpush1.bf16.msra.mxu0 0
  %63 = vmatprep.subr.bf16.mxu0 0
  %64 = vmatpush1.bf16.msra.mxu0 0
  %65 = vmatprep.subr.bf16.mxu0 0
  %66 = vmatpush1.bf16.msra.mxu0 0
  %67 = vmatprep.subr.bf16.mxu0 0
  %68 = vmatpush1.bf16.msra.mxu0 0
  %69 = vmatprep.subr.bf16.mxu0 0
  %70 = vmatpush1.bf16.msra.mxu0 0
  %71 = vmatprep.subr.bf16.mxu0 0
  %72 = vmatpush1.bf16.msra.mxu0 0
  %73 = vmatprep.subr.bf16.mxu0 0
  %74 = vmatpush1.bf16.msra.mxu0 0
  %75 = vmatprep.subr.bf16.mxu0 0
  %76 = vmatpush1.bf16.msra.mxu0 0
  %77 = vmatprep.subr.bf16.mxu0 0
  %78 = vmatpush1.bf16.msra.mxu0 0
  %79 = vmatprep.subr.bf16.mxu0 0
  %80 = vmatpush1.bf16.msra.mxu0 0
  %81 = vmatprep.subr.bf16.mxu0 0
  %82 = vmatpush1.bf16.msra.mxu0 0
  %83 = vmatprep.mubr.bf16.mxu0 0
  %84 = vmatmul.mubr.bf16.gmra.mrb[0].mxu0 %v49
  %v85 = vpop.f32.mrb[0].mxu0
  %v86 = vadd.f32 %v34, %v85
  %v87 = vpop.f32.mrb[0].mxu0
  %v88 = vpop.f32.mrb[0].mxu0
  %v89 = vpop.f32.mrb[0].mxu0
  %90 = vdwg.mxu0
  %v91 = vmul.f32 %v86, 0.2
  %v92 = vmax.f32 %v86, %v91
  %v93 = vpack.c.bf16 %v92, %v92
  %v94 = vld [vmem:[%s3] sm:$0xf]
  %v95 = vld [vmem:[%s3 + $0x4] sm:$0xf]
  %v96 = vld [vmem:[%s3 + $0x8] sm:$0xf]
  %v97 = vld [vmem:[%s3 + $0xc] sm:$0xf]
  %v98 = vld [vmem:[%s3 + $0x10] sm:$0xf]
  %v99 = vld [vmem:[%s3 + $0x14] sm:$0xf]
  %v100 = vld [vmem:[%s3 + $0x18] sm:$0xf]
  %v101 = vld [vmem:[%s3 + $0x1c] sm:$0xf]
  %v102 = vld [vmem:[%s3 + $0x20] sm:$0xf]
  %v103 = vld [vmem:[%s3 + $0x24] sm:$0xf]
  %v104 = vld [vmem:[%s3 + $0x28] sm:$0xf]
  %v105 = vld [vmem:[%s3 + $0x2c] sm:$0xf]
  %v106 = vld [vmem:[%s3 + $0x30] sm:$0xf]
  %v107 = vld [vmem:[%s3 + $0x34] sm:$0xf]
  %v108 = vld [vmem:[%s3 + $0x38] sm:$0xf]
  %v109 = vld [vmem:[%s3 + $0x3c] sm:$0xf]
  %v110 = vld [vmem:[%s2 + $0x1] sm:$0x1]
  %v111 = vlaneseq
  %v112 = vshrl.u32 %v111, 7
  %v113 = vsub.s32 0, %v112
  %v114 = vrot.slane %v110, %v113
  %v131 = vunpack.c.l.b16 %v94
  %v132 = vunpack.c.l.b16 %v95
  %v133 = vunpack.c.l.b16 %v96
  %v134 = vunpack.c.l.b16 %v97
  %v135 = vunpack.c.l.b16 %v98
  %v136 = vunpack.c.l.b16 %v99
  %v137 = vunpack.c.l.b16 %v100
  %v138 = vunpack.c.l.b16 %v101
  %v139 = vunpack.c.l.b16 %v102
  %v140 = vunpack.c.l.b16 %v103
  %v141 = vunpack.c.l.b16 %v104
  %v142 = vunpack.c.l.b16 %v105
  %v143 = vunpack.c.l.b16 %v106
  %v144 = vunpack.c.l.b16 %v107
  %v145 = vunpack.c.l.b16 %v108
  %v146 = vunpack.c.l.b16 %v109
  %v147 = vpack.c.b16 %v132, %v131
  %v148 = vpack.c.b16 %v134, %v133
  %v149 = vpack.c.b16 %v136, %v135
  %v150 = vpack.c.b16 %v138, %v137
  %v151 = vpack.c.b16 %v140, %v139
  %v152 = vpack.c.b16 %v142, %v141
  %v153 = vpack.c.b16 %v144, %v143
  %v154 = vpack.c.b16 %v146, %v145
  %163 = vmatprep.subr.bf16.mxu0 0
  %164 = vmatpush1.bf16.msra.mxu0 %v147
  %165 = vmatprep.subr.bf16.mxu0 0
  %166 = vmatpush1.bf16.msra.mxu0 %v148
  %167 = vmatprep.subr.bf16.mxu0 0
  %168 = vmatpush1.bf16.msra.mxu0 %v149
  %169 = vmatprep.subr.bf16.mxu0 0
  %170 = vmatpush1.bf16.msra.mxu0 %v150
  %171 = vmatprep.subr.bf16.mxu0 0
  %172 = vmatpush1.bf16.msra.mxu0 %v151
  %173 = vmatprep.subr.bf16.mxu0 0
  %174 = vmatpush1.bf16.msra.mxu0 %v152
  %175 = vmatprep.subr.bf16.mxu0 0
  %176 = vmatpush1.bf16.msra.mxu0 %v153
  %177 = vmatprep.subr.bf16.mxu0 0
  %178 = vmatpush1.bf16.msra.mxu0 %v154
  %179 = vmatprep.subr.bf16.mxu0 0
  %180 = vmatpush1.bf16.msra.mxu0 0
  %181 = vmatprep.subr.bf16.mxu0 0
  %182 = vmatpush1.bf16.msra.mxu0 0
  %183 = vmatprep.subr.bf16.mxu0 0
  %184 = vmatpush1.bf16.msra.mxu0 0
  %185 = vmatprep.subr.bf16.mxu0 0
  %186 = vmatpush1.bf16.msra.mxu0 0
  %187 = vmatprep.subr.bf16.mxu0 0
  %188 = vmatpush1.bf16.msra.mxu0 0
  %189 = vmatprep.subr.bf16.mxu0 0
  %190 = vmatpush1.bf16.msra.mxu0 0
  %191 = vmatprep.subr.bf16.mxu0 0
  %192 = vmatpush1.bf16.msra.mxu0 0
  %193 = vmatprep.subr.bf16.mxu0 0
  %194 = vmatpush1.bf16.msra.mxu0 0
  %195 = vmatprep.mubr.bf16.mxu0 0
  %196 = vmatmul.mubr.bf16.gmra.mrb[0].mxu0 %v93
  %v197 = vpop.f32.mrb[0].mxu0
  %v198 = vadd.f32 %v114, %v197
  %v199 = vpop.f32.mrb[0].mxu0
  %v200 = vpop.f32.mrb[0].mxu0
  %v201 = vpop.f32.mrb[0].mxu0
  %202 = vdwg.mxu0
  %v203 = vmul.f32 %v198, 0.2
  %v204 = vmax.f32 %v198, %v203
  %v205 = vpack.c.bf16 %v204, %v204
  %s206 = scalar_lea.vmem %s3, 64
  %v207 = vld [vmem:[%s206] sm:$0xf]
  %v208 = vld [vmem:[%s206 + $0x4] sm:$0xf]
  %v209 = vld [vmem:[%s206 + $0x8] sm:$0xf]
  %v210 = vld [vmem:[%s206 + $0xc] sm:$0xf]
  %v211 = vld [vmem:[%s206 + $0x10] sm:$0xf]
  %v212 = vld [vmem:[%s206 + $0x14] sm:$0xf]
  %v213 = vld [vmem:[%s206 + $0x18] sm:$0xf]
  %v214 = vld [vmem:[%s206 + $0x1c] sm:$0xf]
  %v215 = vld [vmem:[%s206 + $0x20] sm:$0xf]
  %v216 = vld [vmem:[%s206 + $0x24] sm:$0xf]
  %v217 = vld [vmem:[%s206 + $0x28] sm:$0xf]
  %v218 = vld [vmem:[%s206 + $0x2c] sm:$0xf]
  %v219 = vld [vmem:[%s206 + $0x30] sm:$0xf]
  %v220 = vld [vmem:[%s206 + $0x34] sm:$0xf]
  %v221 = vld [vmem:[%s206 + $0x38] sm:$0xf]
  %v222 = vld [vmem:[%s206 + $0x3c] sm:$0xf]
  %v223 = vld [vmem:[%s2 + $0x2] sm:$0x1]
  %v224 = vlaneseq
  %v225 = vshrl.u32 %v224, 7
  %v226 = vsub.s32 0, %v225
  %v227 = vrot.slane %v223, %v226
  %v244 = vunpack.c.l.b16 %v207
  %v245 = vunpack.c.l.b16 %v208
  %v246 = vunpack.c.l.b16 %v209
  %v247 = vunpack.c.l.b16 %v210
  %v248 = vunpack.c.l.b16 %v211
  %v249 = vunpack.c.l.b16 %v212
  %v250 = vunpack.c.l.b16 %v213
  %v251 = vunpack.c.l.b16 %v214
  %v252 = vunpack.c.l.b16 %v215
  %v253 = vunpack.c.l.b16 %v216
  %v254 = vunpack.c.l.b16 %v217
  %v255 = vunpack.c.l.b16 %v218
  %v256 = vunpack.c.l.b16 %v219
  %v257 = vunpack.c.l.b16 %v220
  %v258 = vunpack.c.l.b16 %v221
  %v259 = vunpack.c.l.b16 %v222
  %v260 = vpack.c.b16 %v245, %v244
  %v261 = vpack.c.b16 %v247, %v246
  %v262 = vpack.c.b16 %v249, %v248
  %v263 = vpack.c.b16 %v251, %v250
  %v264 = vpack.c.b16 %v253, %v252
  %v265 = vpack.c.b16 %v255, %v254
  %v266 = vpack.c.b16 %v257, %v256
  %v267 = vpack.c.b16 %v259, %v258
  %276 = vmatprep.subr.bf16.mxu0 0
  %277 = vmatpush1.bf16.msra.mxu0 %v260
  %278 = vmatprep.subr.bf16.mxu0 0
  %279 = vmatpush1.bf16.msra.mxu0 %v261
  %280 = vmatprep.subr.bf16.mxu0 0
  %281 = vmatpush1.bf16.msra.mxu0 %v262
  %282 = vmatprep.subr.bf16.mxu0 0
  %283 = vmatpush1.bf16.msra.mxu0 %v263
  %284 = vmatprep.subr.bf16.mxu0 0
  %285 = vmatpush1.bf16.msra.mxu0 %v264
  %286 = vmatprep.subr.bf16.mxu0 0
  %287 = vmatpush1.bf16.msra.mxu0 %v265
  %288 = vmatprep.subr.bf16.mxu0 0
  %289 = vmatpush1.bf16.msra.mxu0 %v266
  %290 = vmatprep.subr.bf16.mxu0 0
  %291 = vmatpush1.bf16.msra.mxu0 %v267
  %292 = vmatprep.subr.bf16.mxu0 0
  %293 = vmatpush1.bf16.msra.mxu0 0
  %294 = vmatprep.subr.bf16.mxu0 0
  %295 = vmatpush1.bf16.msra.mxu0 0
  %296 = vmatprep.subr.bf16.mxu0 0
  %297 = vmatpush1.bf16.msra.mxu0 0
  %298 = vmatprep.subr.bf16.mxu0 0
  %299 = vmatpush1.bf16.msra.mxu0 0
  %300 = vmatprep.subr.bf16.mxu0 0
  %301 = vmatpush1.bf16.msra.mxu0 0
  %302 = vmatprep.subr.bf16.mxu0 0
  %303 = vmatpush1.bf16.msra.mxu0 0
  %304 = vmatprep.subr.bf16.mxu0 0
  %305 = vmatpush1.bf16.msra.mxu0 0
  %306 = vmatprep.subr.bf16.mxu0 0
  %307 = vmatpush1.bf16.msra.mxu0 0
  %308 = vmatprep.mubr.bf16.mxu0 0
  %309 = vmatmul.mubr.bf16.gmra.mrb[0].mxu0 %v205
  %v310 = vpop.f32.mrb[0].mxu0
  %v311 = vadd.f32 %v227, %v310
  %v312 = vpop.f32.mrb[0].mxu0
  %v313 = vpop.f32.mrb[0].mxu0
  %v314 = vpop.f32.mrb[0].mxu0
  %315 = vdwg.mxu0
  %v316 = vmul.f32 %v311, 0.2
  %v317 = vmax.f32 %v311, %v316
  %v318 = vpack.c.bf16 %v317, %v317
  %s319 = scalar_lea.vmem %s3, 128
  %v320 = vld [vmem:[%s319] sm:$0xf]
  %v321 = vld [vmem:[%s319 + $0x4] sm:$0xf]
  %v322 = vld [vmem:[%s319 + $0x8] sm:$0xf]
  %v323 = vld [vmem:[%s319 + $0xc] sm:$0xf]
  %v324 = vld [vmem:[%s319 + $0x10] sm:$0xf]
  %v325 = vld [vmem:[%s319 + $0x14] sm:$0xf]
  %v326 = vld [vmem:[%s319 + $0x18] sm:$0xf]
  %v327 = vld [vmem:[%s319 + $0x1c] sm:$0xf]
  %v328 = vld [vmem:[%s319 + $0x20] sm:$0xf]
  %v329 = vld [vmem:[%s319 + $0x24] sm:$0xf]
  %v330 = vld [vmem:[%s319 + $0x28] sm:$0xf]
  %v331 = vld [vmem:[%s319 + $0x2c] sm:$0xf]
  %v332 = vld [vmem:[%s319 + $0x30] sm:$0xf]
  %v333 = vld [vmem:[%s319 + $0x34] sm:$0xf]
  %v334 = vld [vmem:[%s319 + $0x38] sm:$0xf]
  %v335 = vld [vmem:[%s319 + $0x3c] sm:$0xf]
  %v336 = vld [vmem:[%s2 + $0x3] sm:$0x1]
  %v337 = vlaneseq
  %v338 = vshrl.u32 %v337, 7
  %v339 = vsub.s32 0, %v338
  %v340 = vrot.slane %v336, %v339
  %v357 = vunpack.c.l.b16 %v320
  %v358 = vunpack.c.l.b16 %v321
  %v359 = vunpack.c.l.b16 %v322
  %v360 = vunpack.c.l.b16 %v323
  %v361 = vunpack.c.l.b16 %v324
  %v362 = vunpack.c.l.b16 %v325
  %v363 = vunpack.c.l.b16 %v326
  %v364 = vunpack.c.l.b16 %v327
  %v365 = vunpack.c.l.b16 %v328
  %v366 = vunpack.c.l.b16 %v329
  %v367 = vunpack.c.l.b16 %v330
  %v368 = vunpack.c.l.b16 %v331
  %v369 = vunpack.c.l.b16 %v332
  %v370 = vunpack.c.l.b16 %v333
  %v371 = vunpack.c.l.b16 %v334
  %v372 = vunpack.c.l.b16 %v335
  %v373 = vpack.c.b16 %v358, %v357
  %v374 = vpack.c.b16 %v360, %v359
  %v375 = vpack.c.b16 %v362, %v361
  %v376 = vpack.c.b16 %v364, %v363
  %v377 = vpack.c.b16 %v366, %v365
  %v378 = vpack.c.b16 %v368, %v367
  %v379 = vpack.c.b16 %v370, %v369
  %v380 = vpack.c.b16 %v372, %v371
  %389 = vmatprep.subr.bf16.mxu0 0
  %390 = vmatpush1.bf16.msra.mxu0 %v373
  %391 = vmatprep.subr.bf16.mxu0 0
  %392 = vmatpush1.bf16.msra.mxu0 %v374
  %393 = vmatprep.subr.bf16.mxu0 0
  %394 = vmatpush1.bf16.msra.mxu0 %v375
  %395 = vmatprep.subr.bf16.mxu0 0
  %396 = vmatpush1.bf16.msra.mxu0 %v376
  %397 = vmatprep.subr.bf16.mxu0 0
  %398 = vmatpush1.bf16.msra.mxu0 %v377
  %399 = vmatprep.subr.bf16.mxu0 0
  %400 = vmatpush1.bf16.msra.mxu0 %v378
  %401 = vmatprep.subr.bf16.mxu0 0
  %402 = vmatpush1.bf16.msra.mxu0 %v379
  %403 = vmatprep.subr.bf16.mxu0 0
  %404 = vmatpush1.bf16.msra.mxu0 %v380
  %405 = vmatprep.subr.bf16.mxu0 0
  %406 = vmatpush1.bf16.msra.mxu0 0
  %407 = vmatprep.subr.bf16.mxu0 0
  %408 = vmatpush1.bf16.msra.mxu0 0
  %409 = vmatprep.subr.bf16.mxu0 0
  %410 = vmatpush1.bf16.msra.mxu0 0
  %411 = vmatprep.subr.bf16.mxu0 0
  %412 = vmatpush1.bf16.msra.mxu0 0
  %413 = vmatprep.subr.bf16.mxu0 0
  %414 = vmatpush1.bf16.msra.mxu0 0
  %415 = vmatprep.subr.bf16.mxu0 0
  %416 = vmatpush1.bf16.msra.mxu0 0
  %417 = vmatprep.subr.bf16.mxu0 0
  %418 = vmatpush1.bf16.msra.mxu0 0
  %419 = vmatprep.subr.bf16.mxu0 0
  %420 = vmatpush1.bf16.msra.mxu0 0
  %421 = vmatprep.mubr.bf16.mxu0 0
  %422 = vmatmul.mubr.bf16.gmra.mrb[0].mxu0 %v318
  %v423 = vpop.f32.mrb[0].mxu0
  %v424 = vadd.f32 %v340, %v423
  %v425 = vpop.f32.mrb[0].mxu0
  %v426 = vpop.f32.mrb[0].mxu0
  %v427 = vpop.f32.mrb[0].mxu0
  %428 = vdwg.mxu0
  %v429 = vmul.f32 %v424, 0.2
  %v430 = vmax.f32 %v424, %v429
  %v431 = vpack.c.bf16 %v430, %v430
  %s432 = scalar_lea.vmem %s3, 192
  %v433 = vld [vmem:[%s432] sm:$0xf]
  %v434 = vld [vmem:[%s432 + $0x4] sm:$0xf]
  %v435 = vld [vmem:[%s432 + $0x8] sm:$0xf]
  %v436 = vld [vmem:[%s432 + $0xc] sm:$0xf]
  %v437 = vld [vmem:[%s432 + $0x10] sm:$0xf]
  %v438 = vld [vmem:[%s432 + $0x14] sm:$0xf]
  %v439 = vld [vmem:[%s432 + $0x18] sm:$0xf]
  %v440 = vld [vmem:[%s432 + $0x1c] sm:$0xf]
  %v441 = vld [vmem:[%s432 + $0x20] sm:$0xf]
  %v442 = vld [vmem:[%s432 + $0x24] sm:$0xf]
  %v443 = vld [vmem:[%s432 + $0x28] sm:$0xf]
  %v444 = vld [vmem:[%s432 + $0x2c] sm:$0xf]
  %v445 = vld [vmem:[%s432 + $0x30] sm:$0xf]
  %v446 = vld [vmem:[%s432 + $0x34] sm:$0xf]
  %v447 = vld [vmem:[%s432 + $0x38] sm:$0xf]
  %v448 = vld [vmem:[%s432 + $0x3c] sm:$0xf]
  %v449 = vld [vmem:[%s2 + $0x4] sm:$0x1]
  %v450 = vlaneseq
  %v451 = vshrl.u32 %v450, 7
  %v452 = vsub.s32 0, %v451
  %v453 = vrot.slane %v449, %v452
  %v470 = vunpack.c.l.b16 %v433
  %v471 = vunpack.c.l.b16 %v434
  %v472 = vunpack.c.l.b16 %v435
  %v473 = vunpack.c.l.b16 %v436
  %v474 = vunpack.c.l.b16 %v437
  %v475 = vunpack.c.l.b16 %v438
  %v476 = vunpack.c.l.b16 %v439
  %v477 = vunpack.c.l.b16 %v440
  %v478 = vunpack.c.l.b16 %v441
  %v479 = vunpack.c.l.b16 %v442
  %v480 = vunpack.c.l.b16 %v443
  %v481 = vunpack.c.l.b16 %v444
  %v482 = vunpack.c.l.b16 %v445
  %v483 = vunpack.c.l.b16 %v446
  %v484 = vunpack.c.l.b16 %v447
  %v485 = vunpack.c.l.b16 %v448
  %v486 = vpack.c.b16 %v471, %v470
  %v487 = vpack.c.b16 %v473, %v472
  %v488 = vpack.c.b16 %v475, %v474
  %v489 = vpack.c.b16 %v477, %v476
  %v490 = vpack.c.b16 %v479, %v478
  %v491 = vpack.c.b16 %v481, %v480
  %v492 = vpack.c.b16 %v483, %v482
  %v493 = vpack.c.b16 %v485, %v484
  %502 = vmatprep.subr.bf16.mxu0 0
  %503 = vmatpush1.bf16.msra.mxu0 %v486
  %504 = vmatprep.subr.bf16.mxu0 0
  %505 = vmatpush1.bf16.msra.mxu0 %v487
  %506 = vmatprep.subr.bf16.mxu0 0
  %507 = vmatpush1.bf16.msra.mxu0 %v488
  %508 = vmatprep.subr.bf16.mxu0 0
  %509 = vmatpush1.bf16.msra.mxu0 %v489
  %510 = vmatprep.subr.bf16.mxu0 0
  %511 = vmatpush1.bf16.msra.mxu0 %v490
  %512 = vmatprep.subr.bf16.mxu0 0
  %513 = vmatpush1.bf16.msra.mxu0 %v491
  %514 = vmatprep.subr.bf16.mxu0 0
  %515 = vmatpush1.bf16.msra.mxu0 %v492
  %516 = vmatprep.subr.bf16.mxu0 0
  %517 = vmatpush1.bf16.msra.mxu0 %v493
  %518 = vmatprep.subr.bf16.mxu0 0
  %519 = vmatpush1.bf16.msra.mxu0 0
  %520 = vmatprep.subr.bf16.mxu0 0
  %521 = vmatpush1.bf16.msra.mxu0 0
  %522 = vmatprep.subr.bf16.mxu0 0
  %523 = vmatpush1.bf16.msra.mxu0 0
  %524 = vmatprep.subr.bf16.mxu0 0
  %525 = vmatpush1.bf16.msra.mxu0 0
  %526 = vmatprep.subr.bf16.mxu0 0
  %527 = vmatpush1.bf16.msra.mxu0 0
  %528 = vmatprep.subr.bf16.mxu0 0
  %529 = vmatpush1.bf16.msra.mxu0 0
  %530 = vmatprep.subr.bf16.mxu0 0
  %531 = vmatpush1.bf16.msra.mxu0 0
  %532 = vmatprep.subr.bf16.mxu0 0
  %533 = vmatpush1.bf16.msra.mxu0 0
  %534 = vmatprep.mubr.bf16.mxu0 0
  %535 = vmatmul.mubr.bf16.gmra.mrb[0].mxu0 %v431
  %v536 = vpop.f32.mrb[0].mxu0
  %v537 = vadd.f32 %v453, %v536
  %v538 = vpop.f32.mrb[0].mxu0
  %v539 = vpop.f32.mrb[0].mxu0
  %v540 = vpop.f32.mrb[0].mxu0
  %541 = vdwg.mxu0
  %v542 = vmul.f32 %v537, 0.2
  %v543 = vmax.f32 %v537, %v542
  %v544 = vpack.c.bf16 %v543, %v543
  %v545 = vld [vmem:[%s4] sm:$0xf]
  %v546 = vld [vmem:[%s4 + $0x4] sm:$0xf]
  %v547 = vld [vmem:[%s4 + $0x8] sm:$0xf]
  %v548 = vld [vmem:[%s4 + $0xc] sm:$0xf]
  %v549 = vld [vmem:[%s4 + $0x10] sm:$0xf]
  %v550 = vld [vmem:[%s4 + $0x14] sm:$0xf]
  %v551 = vld [vmem:[%s4 + $0x18] sm:$0xf]
  %v552 = vld [vmem:[%s4 + $0x1c] sm:$0xf]
  %v553 = vld [vmem:[%s4 + $0x20] sm:$0xf]
  %v554 = vld [vmem:[%s4 + $0x24] sm:$0xf]
  %v555 = vld [vmem:[%s4 + $0x28] sm:$0xf]
  %v556 = vld [vmem:[%s4 + $0x2c] sm:$0xf]
  %v557 = vld [vmem:[%s4 + $0x30] sm:$0xf]
  %v558 = vld [vmem:[%s4 + $0x34] sm:$0xf]
  %v559 = vld [vmem:[%s4 + $0x38] sm:$0xf]
  %v560 = vld [vmem:[%s4 + $0x3c] sm:$0xf]
  %v561 = vld [vmem:[%s5] sm:$0x1]
  %v563 = vlaneseq
  %v564 = vshrl.u32 %v563, 7
  %v565 = vsub.s32 0, %v564
  %v566 = vrot.slane %v561, %v565
  %v584 = vunpack.c.l.b16 %v545
  %v585 = vunpack.c.l.b16 %v546
  %v586 = vunpack.c.l.b16 %v547
  %v587 = vunpack.c.l.b16 %v548
  %v588 = vunpack.c.l.b16 %v549
  %v589 = vunpack.c.l.b16 %v550
  %v590 = vunpack.c.l.b16 %v551
  %v591 = vunpack.c.l.b16 %v552
  %v592 = vunpack.c.l.b16 %v553
  %v593 = vunpack.c.l.b16 %v554
  %v594 = vunpack.c.l.b16 %v555
  %v595 = vunpack.c.l.b16 %v556
  %v596 = vunpack.c.l.b16 %v557
  %v597 = vunpack.c.l.b16 %v558
  %v598 = vunpack.c.l.b16 %v559
  %v599 = vunpack.c.l.b16 %v560
  %v600 = vpack.c.b16 %v585, %v584
  %v601 = vpack.c.b16 %v587, %v586
  %v602 = vpack.c.b16 %v589, %v588
  %v603 = vpack.c.b16 %v591, %v590
  %v604 = vpack.c.b16 %v593, %v592
  %v605 = vpack.c.b16 %v595, %v594
  %v606 = vpack.c.b16 %v597, %v596
  %v607 = vpack.c.b16 %v599, %v598
  %616 = vmatprep.subr.bf16.mxu0 0
  %617 = vmatpush1.bf16.msra.mxu0 %v600
  %618 = vmatprep.subr.bf16.mxu0 0
  %619 = vmatpush1.bf16.msra.mxu0 %v601
  %620 = vmatprep.subr.bf16.mxu0 0
  %621 = vmatpush1.bf16.msra.mxu0 %v602
  %622 = vmatprep.subr.bf16.mxu0 0
  %623 = vmatpush1.bf16.msra.mxu0 %v603
  %624 = vmatprep.subr.bf16.mxu0 0
  %625 = vmatpush1.bf16.msra.mxu0 %v604
  %626 = vmatprep.subr.bf16.mxu0 0
  %627 = vmatpush1.bf16.msra.mxu0 %v605
  %628 = vmatprep.subr.bf16.mxu0 0
  %629 = vmatpush1.bf16.msra.mxu0 %v606
  %630 = vmatprep.subr.bf16.mxu0 0
  %631 = vmatpush1.bf16.msra.mxu0 %v607
  %632 = vmatprep.subr.bf16.mxu0 0
  %633 = vmatpush1.bf16.msra.mxu0 0
  %634 = vmatprep.subr.bf16.mxu0 0
  %635 = vmatpush1.bf16.msra.mxu0 0
  %636 = vmatprep.subr.bf16.mxu0 0
  %637 = vmatpush1.bf16.msra.mxu0 0
  %638 = vmatprep.subr.bf16.mxu0 0
  %639 = vmatpush1.bf16.msra.mxu0 0
  %640 = vmatprep.subr.bf16.mxu0 0
  %641 = vmatpush1.bf16.msra.mxu0 0
  %642 = vmatprep.subr.bf16.mxu0 0
  %643 = vmatpush1.bf16.msra.mxu0 0
  %644 = vmatprep.subr.bf16.mxu0 0
  %645 = vmatpush1.bf16.msra.mxu0 0
  %646 = vmatprep.subr.bf16.mxu0 0
  %647 = vmatpush1.bf16.msra.mxu0 0
  %648 = vmatprep.mubr.bf16.mxu0 0
  %649 = vmatmul.mubr.bf16.gmra.mrb[0].mxu0 %v544
  %v650 = vpop.f32.mrb[0].mxu0
  %v651 = vadd.f32 %v566, %v650
  %v652 = vpop.f32.mrb[0].mxu0
  %v653 = vpop.f32.mrb[0].mxu0
  %v654 = vpop.f32.mrb[0].mxu0
  %655 = vdwg.mxu0
  %v656 = vmul.f32 %v651, 0.2
  %v657 = vmax.f32 %v651, %v656
  %v658 = vpack.c.bf16 %v657, %v657
  %659 = vst [vmem:[%s6] sm:$0xf] %v658
  // Predicated region
  $region26: #{mapping_from_latent.1} parent=0 // pred_check
    _
  $region27: #{mapping_from_latent.1} parent=0 // pred_check_branch
    %661 = sbr.rel (0) target = $region29
  $region28: #{mapping_from_latent.1} parent=0 // pred_region
    _
  $region29: #{mapping_from_latent.1} parent=0 // pred_fallthru
    _
  // Predicated region
  $region30: #{mapping_from_latent.1} parent=0 // pred_check
    _
  $region31: #{mapping_from_latent.1} parent=0 // pred_check_branch
    %663 = sbr.rel (0) target = $region33
  $region32: #{mapping_from_latent.1} parent=0 // pred_region
    _
  $region33: #{mapping_from_latent.1} parent=0 // pred_fallthru
    _

</llo_original>
